<compile_context>
chip_gen: v6e
topology: v6e:2x2x1
jax: 0.10.0
libtpu: 0.0.40
codegen_flags: <defaults>
</compile_context>

<pallas_src>
import functools
import math

import jax
import jax.numpy as jnp
from jax import lax
from jax.experimental import pallas as pl
from jax.experimental.pallas import tpu as pltpu

_LANES = 128
_SUBLANE_MULT = 16           # sublane multiple safe for f32 and bf16 inputs
_MAX_ROWS_PER_BLOCK = 256    # 256*128 pixels/step -> ~1.2 MiB of inputs/step


def _round_up(x, m):
    return ((x + m - 1) // m) * m


def _giou_kernel(p_ref, t_ref, w_ref, num_ref, den_ref, *, width):
    """One (rows_blk, 128) pixel tile of one batch element."""
    tblk = pl.program_id(1)

    # Output blocks are resident across the pixel axis: init on first tile.
    @pl.when(tblk == 0)
    def _():
        num_ref[...] = jnp.zeros_like(num_ref)
        den_ref[...] = jnp.zeros_like(den_ref)

    w = w_ref[...].astype(jnp.float32)            # (rows_blk, 128)
    rows_blk, lanes = w.shape

    # Flattened pixel index -> (shift_x, shift_y).
    row = lax.broadcasted_iota(jnp.int32, (rows_blk, lanes), 0) + tblk * rows_blk
    lane = lax.broadcasted_iota(jnp.int32, (rows_blk, lanes), 1)
    idx = row * lanes + lane
    if width & (width - 1) == 0:                  # power of two: shift / mask
        shift_x = (idx & (width - 1)).astype(jnp.float32)
        shift_y = (idx >> int(math.log2(width))).astype(jnp.float32)
    else:
        shift_x = (idx % width).astype(jnp.float32)
        shift_y = (idx // width).astype(jnp.float32)

    def plane(ref, i):
        return ref[i].astype(jnp.float32)

    # Predicted boxes: (shift - preds[:, [0,1]], shift + preds[:, [2,3]]).
    px1 = shift_x - plane(p_ref, 0)
    py1 = shift_y - plane(p_ref, 1)
    px2 = shift_x + plane(p_ref, 2)
    py2 = shift_y + plane(p_ref, 3)

    # Ground-truth boxes.
    gx1 = plane(t_ref, 0)
    gy1 = plane(t_ref, 1)
    gx2 = plane(t_ref, 2)
    gy2 = plane(t_ref, 3)

    mask = w > 0.0
    w_m = jnp.where(mask, w, 0.0)                 # excludes w <= 0 and padding

    # Intersection.
    wh_x = jnp.maximum(jnp.minimum(px2, gx2) - jnp.maximum(px1, gx1) + 1.0, 0.0)
    wh_y = jnp.maximum(jnp.minimum(py2, gy2) - jnp.maximum(py1, gy1) + 1.0, 0.0)
    overlap = wh_x * wh_y

    # Enclosing box.
    ewh_x = jnp.maximum(jnp.maximum(px2, gx2) - jnp.minimum(px1, gx1) + 1.0, 0.0)
    ewh_y = jnp.maximum(jnp.maximum(py2, gy2) - jnp.minimum(py1, gy1) + 1.0, 0.0)
    enclose_area = ewh_x * ewh_y

    pred_area = (px2 - px1 + 1.0) * (py2 - py1 + 1.0)
    gt_area = (gx2 - gx1 + 1.0) * (gy2 - gy1 + 1.0)
    u = pred_area + gt_area - overlap

    # Safe denominators only on masked-out pixels (they never contribute:
    # w_m == 0 there).  Reciprocals go to the EUP slot.
    inv_u = pl.reciprocal(jnp.where(mask, u, 1.0))
    inv_ea = pl.reciprocal(jnp.where(mask, enclose_area, 1.0))

    # 1 - giou = 1 - (overlap/u - (ea - u)/ea) = 2 - overlap/u - u/ea
    iou_distance = 2.0 - overlap * inv_u - u * inv_ea

    # Elementwise partial sums; reduced once in the JAX wrapper.
    num_ref[...] += iou_distance * w_m
    den_ref[...] += w_m


def giou_loss(preds, targets, weight):
    """preds/targets: (B, 4, H, W); weight: (B, H, W) or (B, 1, H, W)."""
    B, C, H, W = preds.shape
    assert C == 4
    assert targets.shape == (B, 4, H, W)
    weight = weight.reshape(B, H, W)

    n = H * W
    n_rows = -(-n // _LANES)
    rows_blk = min(_MAX_ROWS_PER_BLOCK, _round_up(n_rows, _SUBLANE_MULT))
    rows_blk = _round_up(rows_blk, _SUBLANE_MULT)
    n_rows_pad = _round_up(n_rows, rows_blk)
    n_pad = n_rows_pad * _LANES
    n_blocks = n_rows_pad // rows_blk

    def prep_boxes(x):
        x = x.reshape(B, 4, n)
        if n_pad != n:
            x = jnp.pad(x, ((0, 0), (0, 0), (0, n_pad - n)))
        return x.reshape(B, 4, n_rows_pad, _LANES)

    p = prep_boxes(preds)
    t = prep_boxes(targets)
    w = weight.reshape(B, n)
    if n_pad != n:
        w = jnp.pad(w, ((0, 0), (0, n_pad - n)))
    w = w.reshape(B, n_rows_pad, _LANES)

    kernel = functools.partial(_giou_kernel, width=W)

    num_p, den_p = pl.pallas_call(
        kernel,
        out_shape=(
            jax.ShapeDtypeStruct((B, rows_blk, _LANES), jnp.float32),
            jax.ShapeDtypeStruct((B, rows_blk, _LANES), jnp.float32),
        ),
        grid_spec=pltpu.PrefetchScalarGridSpec(
            num_scalar_prefetch=0,
            grid=(B, n_blocks),
            in_specs=[
                pl.BlockSpec((pl.Squeezed(), 4, rows_blk, _LANES),
                             lambda b, tb: (b, 0, tb, 0)),
                pl.BlockSpec((pl.Squeezed(), 4, rows_blk, _LANES),
                             lambda b, tb: (b, 0, tb, 0)),
                pl.BlockSpec((pl.Squeezed(), rows_blk, _LANES),
                             lambda b, tb: (b, tb, 0)),
            ],
            out_specs=[
                pl.BlockSpec((pl.Squeezed(), rows_blk, _LANES),
                             lambda b, tb: (b, 0, 0)),
                pl.BlockSpec((pl.Squeezed(), rows_blk, _LANES),
                             lambda b, tb: (b, 0, 0)),
            ],
        ),
        compiler_params=pltpu.CompilerParams(
            dimension_semantics=("parallel", "arbitrary")),
    )(p, t, w)

    num = jnp.sum(num_p)
    avg_factor = jnp.sum(den_p)
    # TODO(synk): PyTorch prints 'avg is zero' and returns 0.0 when
    # avg_factor == 0; we reproduce the value (0.0) but not the print.
    return jnp.where(avg_factor == 0.0, jnp.float32(0.0), num / avg_factor)


def _giou_loss_ref(preds, targets, weight):
    """Pure-JAX reference mirroring the PyTorch forward (silent check)."""
    B, _, H, W = preds.shape
    weight = weight.reshape(B, H, W)
    sx = jnp.broadcast_to(jnp.arange(W, dtype=jnp.float32), (H, W))
    sy = jnp.broadcast_to(jnp.arange(H, dtype=jnp.float32)[:, None], (H, W))
    px1 = sx - preds[:, 0]; py1 = sy - preds[:, 1]
    px2 = sx + preds[:, 2]; py2 = sy + preds[:, 3]
    gx1, gy1, gx2, gy2 = targets[:, 0], targets[:, 1], targets[:, 2], targets[:, 3]
    mask = weight > 0
    wh_x = jnp.clip(jnp.minimum(px2, gx2) - jnp.maximum(px1, gx1) + 1, 0)
    wh_y = jnp.clip(jnp.minimum(py2, gy2) - jnp.maximum(py1, gy1) + 1, 0)
    ewh_x = jnp.clip(jnp.maximum(px2, gx2) - jnp.minimum(px1, gx1) + 1, 0)
    ewh_y = jnp.clip(jnp.maximum(py2, gy2) - jnp.minimum(py1, gy1) + 1, 0)
    overlap = wh_x * wh_y
    enclose_area = ewh_x * ewh_y
    pa = (px2 - px1 + 1) * (py2 - py1 + 1)
    ga = (gx2 - gx1 + 1) * (gy2 - gy1 + 1)
    u = pa + ga - overlap
    u_s = jnp.where(mask, u, 1.0)
    ea_s = jnp.where(mask, enclose_area, 1.0)
    gious = overlap / u_s - (ea_s - u) / ea_s
    dist = 1.0 - gious
    num = jnp.sum(jnp.where(mask, dist * weight, 0.0))
    den = jnp.sum(jnp.where(mask, weight, 0.0))
    return jnp.where(den == 0, 0.0, num / den)


if __name__ == "__main__":
    key = jax.random.PRNGKey(0)
    k1, k2, k3 = jax.random.split(key, 3)
    B, H, W = 2, 16, 16
    # preds are (positive) distances to box sides; targets are gt boxes in
    # (x1, y1, x2, y2); weight has some zero entries.
    preds = jax.random.uniform(k1, (B, 4, H, W), jnp.float32, 0.5, 4.0)
    cx = jnp.broadcast_to(jnp.arange(W, dtype=jnp.float32), (B, H, W))
    cy = jnp.broadcast_to(jnp.arange(H, dtype=jnp.float32)[:, None], (B, H, W))
    ext = jax.random.uniform(k2, (B, 4, H, W), jnp.float32, 0.5, 3.0)
    targets = jnp.stack(
        [cx - ext[:, 0], cy - ext[:, 1], cx + ext[:, 2], cy + ext[:, 3]], axis=1)
    weight = jnp.clip(jax.random.normal(k3, (B, H, W), jnp.float32), 0.0)

    out = giou_loss(preds, targets, weight)
    jax.block_until_ready(out)

    ref = _giou_loss_ref(preds, targets, weight)
    assert jnp.allclose(out, ref, rtol=1e-5, atol=1e-5), (out, ref)
    print("KERNEL_OK")
</pallas_src>

<mosaic_0001>
module attributes {stable_mosaic.version = 11 : i64} {
  func.func @_giou_kernel(%arg0: i32, %arg1: i32, %arg2: memref<1x4x16x128xf32, #tpu.memory_space<vmem>>, %arg3: memref<1x4x16x128xf32, #tpu.memory_space<vmem>>, %arg4: memref<1x16x128xf32, #tpu.memory_space<vmem>>, %arg5: memref<1x16x128xf32, #tpu.memory_space<vmem>>, %arg6: memref<1x16x128xf32, #tpu.memory_space<vmem>>) attributes {dimension_semantics = [#tpu.dimension_semantics<parallel>, #tpu.dimension_semantics<arbitrary>], iteration_bounds = array<i64: 2, 1>, scalar_prefetch = 0 : i64, scratch_operands = 0 : i64, tpu.core_type = #tpu.core_type<tc>, window_params = [{transform_indices = @transform_0, window_bounds = array<i64: 1, 4, 16, 128>}, {transform_indices = @transform_1, window_bounds = array<i64: 1, 4, 16, 128>}, {transform_indices = @transform_2, window_bounds = array<i64: 1, 16, 128>}, {transform_indices = @transform_3, window_bounds = array<i64: 1, 16, 128>}, {transform_indices = @transform_4, window_bounds = array<i64: 1, 16, 128>}]} {
    %c0_i32 = arith.constant 0 : i32
    %0 = arith.cmpi eq, %arg1, %c0_i32 : i32
    %1 = arith.extui %0 : i1 to i32
    %c0_i32_0 = arith.constant 0 : i32
    %2 = arith.cmpi ne, %1, %c0_i32_0 : i32
    scf.if %2 {
      %cst_60 = arith.constant 0.000000e+00 : f32
      %113 = vector.broadcast %cst_60 : f32 to vector<16x128xf32>
      %c0_61 = arith.constant 0 : index
      %c0_62 = arith.constant 0 : index
      %c0_63 = arith.constant 0 : index
      %114 = vector.load %arg5[%c0_61, %c0_62, %c0_63] : memref<1x16x128xf32, #tpu.memory_space<vmem>>, vector<1x16x128xf32>
      %115 = vector.shape_cast %114 : vector<1x16x128xf32> to vector<16x128xf32>
      %116 = vector.shape_cast %113 : vector<16x128xf32> to vector<1x16x128xf32>
      tpu.vector_store %arg5[%c0_61, %c0_62, %c0_63], %116 {strides = array<i32>} : memref<1x16x128xf32, #tpu.memory_space<vmem>>, vector<1x16x128xf32>,
      %cst_64 = arith.constant 0.000000e+00 : f32
      %117 = vector.broadcast %cst_64 : f32 to vector<16x128xf32>
      %c0_65 = arith.constant 0 : index
      %c0_66 = arith.constant 0 : index
      %c0_67 = arith.constant 0 : index
      %118 = vector.load %arg6[%c0_65, %c0_66, %c0_67] : memref<1x16x128xf32, #tpu.memory_space<vmem>>, vector<1x16x128xf32>
      %119 = vector.shape_cast %118 : vector<1x16x128xf32> to vector<16x128xf32>
      %120 = vector.shape_cast %117 : vector<16x128xf32> to vector<1x16x128xf32>
      tpu.vector_store %arg6[%c0_65, %c0_66, %c0_67], %120 {strides = array<i32>} : memref<1x16x128xf32, #tpu.memory_space<vmem>>, vector<1x16x128xf32>,
    } else {
    }
    %c0 = arith.constant 0 : index
    %c0_1 = arith.constant 0 : index
    %c0_2 = arith.constant 0 : index
    %3 = vector.load %arg4[%c0, %c0_1, %c0_2] : memref<1x16x128xf32, #tpu.memory_space<vmem>>, vector<1x16x128xf32>
    %4 = vector.shape_cast %3 : vector<1x16x128xf32> to vector<16x128xf32>
    %5 = tpu.iota {dimensions = array<i32: 0>} : vector<16x128xi32>
    %c16_i32 = arith.constant 16 : i32
    %6 = arith.muli %arg1, %c16_i32 : i32
    %7 = vector.broadcast %6 : i32 to vector<16x128xi32>
    %8 = arith.addi %5, %7 : vector<16x128xi32>
    %9 = tpu.iota {dimensions = array<i32: 1>} : vector<16x128xi32>
    %c128_i32 = arith.constant 128 : i32
    %10 = vector.broadcast %c128_i32 : i32 to vector<16x128xi32>
    %11 = arith.muli %8, %10 : vector<16x128xi32>
    %12 = arith.addi %11, %9 : vector<16x128xi32>
    %c15_i32 = arith.constant 15 : i32
    %13 = vector.broadcast %c15_i32 : i32 to vector<16x128xi32>
    %14 = arith.andi %12, %13 : vector<16x128xi32>
    %15 = arith.sitofp %14 : vector<16x128xi32> to vector<16x128xf32>
    %c4_i32 = arith.constant 4 : i32
    %16 = vector.broadcast %c4_i32 : i32 to vector<16x128xi32>
    %17 = arith.shrsi %12, %16 : vector<16x128xi32>
    %18 = arith.sitofp %17 : vector<16x128xi32> to vector<16x128xf32>
    %c0_3 = arith.constant 0 : index
    %c0_4 = arith.constant 0 : index
    %c0_5 = arith.constant 0 : index
    %c0_6 = arith.constant 0 : index
    %19 = vector.load %arg2[%c0_3, %c0_4, %c0_5, %c0_6] : memref<1x4x16x128xf32, #tpu.memory_space<vmem>>, vector<1x1x16x128xf32>
    %20 = vector.shape_cast %19 : vector<1x1x16x128xf32> to vector<16x128xf32>
    %21 = arith.subf %15, %20 : vector<16x128xf32>
    %c0_7 = arith.constant 0 : index
    %c1 = arith.constant 1 : index
    %c0_8 = arith.constant 0 : index
    %c0_9 = arith.constant 0 : index
    %22 = vector.load %arg2[%c0_7, %c1, %c0_8, %c0_9] : memref<1x4x16x128xf32, #tpu.memory_space<vmem>>, vector<1x1x16x128xf32>
    %23 = vector.shape_cast %22 : vector<1x1x16x128xf32> to vector<16x128xf32>
    %24 = arith.subf %18, %23 : vector<16x128xf32>
    %c0_10 = arith.constant 0 : index
    %c2 = arith.constant 2 : index
    %c0_11 = arith.constant 0 : index
    %c0_12 = arith.constant 0 : index
    %25 = vector.load %arg2[%c0_10, %c2, %c0_11, %c0_12] : memref<1x4x16x128xf32, #tpu.memory_space<vmem>>, vector<1x1x16x128xf32>
    %26 = vector.shape_cast %25 : vector<1x1x16x128xf32> to vector<16x128xf32>
    %27 = arith.addf %15, %26 : vector<16x128xf32>
    %c0_13 = arith.constant 0 : index
    %c3 = arith.constant 3 : index
    %c0_14 = arith.constant 0 : index
    %c0_15 = arith.constant 0 : index
    %28 = vector.load %arg2[%c0_13, %c3, %c0_14, %c0_15] : memref<1x4x16x128xf32, #tpu.memory_space<vmem>>, vector<1x1x16x128xf32>
    %29 = vector.shape_cast %28 : vector<1x1x16x128xf32> to vector<16x128xf32>
    %30 = arith.addf %18, %29 : vector<16x128xf32>
    %c0_16 = arith.constant 0 : index
    %c0_17 = arith.constant 0 : index
    %c0_18 = arith.constant 0 : index
    %c0_19 = arith.constant 0 : index
    %31 = vector.load %arg3[%c0_16, %c0_17, %c0_18, %c0_19] : memref<1x4x16x128xf32, #tpu.memory_space<vmem>>, vector<1x1x16x128xf32>
    %32 = vector.shape_cast %31 : vector<1x1x16x128xf32> to vector<16x128xf32>
    %c0_20 = arith.constant 0 : index
    %c1_21 = arith.constant 1 : index
    %c0_22 = arith.constant 0 : index
    %c0_23 = arith.constant 0 : index
    %33 = vector.load %arg3[%c0_20, %c1_21, %c0_22, %c0_23] : memref<1x4x16x128xf32, #tpu.memory_space<vmem>>, vector<1x1x16x128xf32>
    %34 = vector.shape_cast %33 : vector<1x1x16x128xf32> to vector<16x128xf32>
    %c0_24 = arith.constant 0 : index
    %c2_25 = arith.constant 2 : index
    %c0_26 = arith.constant 0 : index
    %c0_27 = arith.constant 0 : index
    %35 = vector.load %arg3[%c0_24, %c2_25, %c0_26, %c0_27] : memref<1x4x16x128xf32, #tpu.memory_space<vmem>>, vector<1x1x16x128xf32>
    %36 = vector.shape_cast %35 : vector<1x1x16x128xf32> to vector<16x128xf32>
    %c0_28 = arith.constant 0 : index
    %c3_29 = arith.constant 3 : index
    %c0_30 = arith.constant 0 : index
    %c0_31 = arith.constant 0 : index
    %37 = vector.load %arg3[%c0_28, %c3_29, %c0_30, %c0_31] : memref<1x4x16x128xf32, #tpu.memory_space<vmem>>, vector<1x1x16x128xf32>
    %38 = vector.shape_cast %37 : vector<1x1x16x128xf32> to vector<16x128xf32>
    %cst = arith.constant 0.000000e+00 : f32
    %39 = vector.broadcast %cst : f32 to vector<16x128xf32>
    %40 = arith.cmpf ogt, %4, %39 : vector<16x128xf32>
    %cst_32 = arith.constant 0.000000e+00 : f32
    %41 = vector.broadcast %cst_32 : f32 to vector<16x128xf32>
    %42 = arith.select %40, %4, %41 : vector<16x128xi1>, vector<16x128xf32>
    %43 = arith.minimumf %27, %36 : vector<16x128xf32>
    %44 = arith.maximumf %21, %32 : vector<16x128xf32>
    %45 = arith.subf %43, %44 : vector<16x128xf32>
    %cst_33 = arith.constant 1.000000e+00 : f32
    %46 = vector.broadcast %cst_33 : f32 to vector<16x128xf32>
    %47 = arith.addf %45, %46 : vector<16x128xf32>
    %cst_34 = arith.constant 0.000000e+00 : f32
    %48 = vector.broadcast %cst_34 : f32 to vector<16x128xf32>
    %49 = arith.maximumf %47, %48 : vector<16x128xf32>
    %50 = arith.minimumf %30, %38 : vector<16x128xf32>
    %51 = arith.maximumf %24, %34 : vector<16x128xf32>
    %52 = arith.subf %50, %51 : vector<16x128xf32>
    %cst_35 = arith.constant 1.000000e+00 : f32
    %53 = vector.broadcast %cst_35 : f32 to vector<16x128xf32>
    %54 = arith.addf %52, %53 : vector<16x128xf32>
    %cst_36 = arith.constant 0.000000e+00 : f32
    %55 = vector.broadcast %cst_36 : f32 to vector<16x128xf32>
    %56 = arith.maximumf %54, %55 : vector<16x128xf32>
    %57 = arith.mulf %49, %56 : vector<16x128xf32>
    %58 = arith.maximumf %27, %36 : vector<16x128xf32>
    %59 = arith.minimumf %21, %32 : vector<16x128xf32>
    %60 = arith.subf %58, %59 : vector<16x128xf32>
    %cst_37 = arith.constant 1.000000e+00 : f32
    %61 = vector.broadcast %cst_37 : f32 to vector<16x128xf32>
    %62 = arith.addf %60, %61 : vector<16x128xf32>
    %cst_38 = arith.constant 0.000000e+00 : f32
    %63 = vector.broadcast %cst_38 : f32 to vector<16x128xf32>
    %64 = arith.maximumf %62, %63 : vector<16x128xf32>
    %65 = arith.maximumf %30, %38 : vector<16x128xf32>
    %66 = arith.minimumf %24, %34 : vector<16x128xf32>
    %67 = arith.subf %65, %66 : vector<16x128xf32>
    %cst_39 = arith.constant 1.000000e+00 : f32
    %68 = vector.broadcast %cst_39 : f32 to vector<16x128xf32>
    %69 = arith.addf %67, %68 : vector<16x128xf32>
    %cst_40 = arith.constant 0.000000e+00 : f32
    %70 = vector.broadcast %cst_40 : f32 to vector<16x128xf32>
    %71 = arith.maximumf %69, %70 : vector<16x128xf32>
    %72 = arith.mulf %64, %71 : vector<16x128xf32>
    %73 = arith.subf %27, %21 : vector<16x128xf32>
    %cst_41 = arith.constant 1.000000e+00 : f32
    %74 = vector.broadcast %cst_41 : f32 to vector<16x128xf32>
    %75 = arith.addf %73, %74 : vector<16x128xf32>
    %76 = arith.subf %30, %24 : vector<16x128xf32>
    %cst_42 = arith.constant 1.000000e+00 : f32
    %77 = vector.broadcast %cst_42 : f32 to vector<16x128xf32>
    %78 = arith.addf %76, %77 : vector<16x128xf32>
    %79 = arith.mulf %75, %78 : vector<16x128xf32>
    %80 = arith.subf %36, %32 : vector<16x128xf32>
    %cst_43 = arith.constant 1.000000e+00 : f32
    %81 = vector.broadcast %cst_43 : f32 to vector<16x128xf32>
    %82 = arith.addf %80, %81 : vector<16x128xf32>
    %83 = arith.subf %38, %34 : vector<16x128xf32>
    %cst_44 = arith.constant 1.000000e+00 : f32
    %84 = vector.broadcast %cst_44 : f32 to vector<16x128xf32>
    %85 = arith.addf %83, %84 : vector<16x128xf32>
    %86 = arith.mulf %82, %85 : vector<16x128xf32>
    %87 = arith.addf %79, %86 : vector<16x128xf32>
    %88 = arith.subf %87, %57 : vector<16x128xf32>
    %cst_45 = arith.constant 1.000000e+00 : f32
    %89 = vector.broadcast %cst_45 : f32 to vector<16x128xf32>
    %90 = arith.select %40, %88, %89 : vector<16x128xi1>, vector<16x128xf32>
    %91 = tpu.reciprocal %90 : vector<16x128xf32> -> vector<16x128xf32>
    %cst_46 = arith.constant 1.000000e+00 : f32
    %92 = vector.broadcast %cst_46 : f32 to vector<16x128xf32>
    %93 = arith.select %40, %72, %92 : vector<16x128xi1>, vector<16x128xf32>
    %94 = tpu.reciprocal %93 : vector<16x128xf32> -> vector<16x128xf32>
    %95 = arith.mulf %57, %91 : vector<16x128xf32>
    %cst_47 = arith.constant 2.000000e+00 : f32
    %96 = vector.broadcast %cst_47 : f32 to vector<16x128xf32>
    %97 = arith.subf %96, %95 : vector<16x128xf32>
    %98 = arith.mulf %88, %94 : vector<16x128xf32>
    %99 = arith.subf %97, %98 : vector<16x128xf32>
    %c0_48 = arith.constant 0 : index
    %c0_49 = arith.constant 0 : index
    %c0_50 = arith.constant 0 : index
    %100 = vector.load %arg5[%c0_48, %c0_49, %c0_50] : memref<1x16x128xf32, #tpu.memory_space<vmem>>, vector<1x16x128xf32>
    %101 = vector.shape_cast %100 : vector<1x16x128xf32> to vector<16x128xf32>
    %102 = arith.mulf %99, %42 : vector<16x128xf32>
    %103 = arith.addf %101, %102 : vector<16x128xf32>
    %c0_51 = arith.constant 0 : index
    %c0_52 = arith.constant 0 : index
    %c0_53 = arith.constant 0 : index
    %104 = vector.load %arg5[%c0_51, %c0_52, %c0_53] : memref<1x16x128xf32, #tpu.memory_space<vmem>>, vector<1x16x128xf32>
    %105 = vector.shape_cast %104 : vector<1x16x128xf32> to vector<16x128xf32>
    %106 = vector.shape_cast %103 : vector<16x128xf32> to vector<1x16x128xf32>
    tpu.vector_store %arg5[%c0_51, %c0_52, %c0_53], %106 {strides = array<i32>} : memref<1x16x128xf32, #tpu.memory_space<vmem>>, vector<1x16x128xf32>,
    %c0_54 = arith.constant 0 : index
    %c0_55 = arith.constant 0 : index
    %c0_56 = arith.constant 0 : index
    %107 = vector.load %arg6[%c0_54, %c0_55, %c0_56] : memref<1x16x128xf32, #tpu.memory_space<vmem>>, vector<1x16x128xf32>
    %108 = vector.shape_cast %107 : vector<1x16x128xf32> to vector<16x128xf32>
    %109 = arith.addf %108, %42 : vector<16x128xf32>
    %c0_57 = arith.constant 0 : index
    %c0_58 = arith.constant 0 : index
    %c0_59 = arith.constant 0 : index
    %110 = vector.load %arg6[%c0_57, %c0_58, %c0_59] : memref<1x16x128xf32, #tpu.memory_space<vmem>>, vector<1x16x128xf32>
    %111 = vector.shape_cast %110 : vector<1x16x128xf32> to vector<16x128xf32>
    %112 = vector.shape_cast %109 : vector<16x128xf32> to vector<1x16x128xf32>
    tpu.vector_store %arg6[%c0_57, %c0_58, %c0_59], %112 {strides = array<i32>} : memref<1x16x128xf32, #tpu.memory_space<vmem>>, vector<1x16x128xf32>,
    return
  }
  func.func @transform_0(%arg0: i32, %arg1: i32) -> (i32, i32, i32, i32) {
    %c0_i32 = arith.constant 0 : i32
    %c0_i32_0 = arith.constant 0 : i32
    %c0_i32_1 = arith.constant 0 : i32
    return %arg0, %c0_i32, %arg1, %c0_i32_0 : i32, i32, i32, i32
  }
  func.func @transform_1(%arg0: i32, %arg1: i32) -> (i32, i32, i32, i32) {
    %c0_i32 = arith.constant 0 : i32
    %c0_i32_0 = arith.constant 0 : i32
    %c0_i32_1 = arith.constant 0 : i32
    return %arg0, %c0_i32, %arg1, %c0_i32_0 : i32, i32, i32, i32
  }
  func.func @transform_2(%arg0: i32, %arg1: i32) -> (i32, i32, i32) {
    %c0_i32 = arith.constant 0 : i32
    %c0_i32_0 = arith.constant 0 : i32
    return %arg0, %arg1, %c0_i32 : i32, i32, i32
  }
  func.func @transform_3(%arg0: i32, %arg1: i32) -> (i32, i32, i32) {
    %c0_i32 = arith.constant 0 : i32
    %c0_i32_0 = arith.constant 0 : i32
    %c0_i32_1 = arith.constant 0 : i32
    return %arg0, %c0_i32, %c0_i32_0 : i32, i32, i32
  }
  func.func @transform_4(%arg0: i32, %arg1: i32) -> (i32, i32, i32) {
    %c0_i32 = arith.constant 0 : i32
    %c0_i32_0 = arith.constant 0 : i32
    %c0_i32_1 = arith.constant 0 : i32
    return %arg0, %c0_i32, %c0_i32_0 : i32, i32, i32
  }
}

</mosaic_0001>

<llo_original>
// kernel: tpu_custom_call.1
$region0: #{tpu_custom_call.1}
  #allocation0 [shape = 'u32[]', space=smem, size = 0x4, offset = 0x4, fixed_abs, tag = 'smem constant byte address 0x4 - core index']
  #allocation1 [shape = 'u32[144,128]{1,0:T(1,128)}', space=vmem, size = 0x12000, scoped, tag = 'internal scratch']
  %s0 = inlined_call_operand.hbm [shape: f32[2,4,16,128], index: 0, kind: input, shape index: {}]
  %s1 = inlined_call_operand.hbm [shape: f32[2,4,16,128], index: 1, kind: input, shape index: {}]
  %s2 = inlined_call_operand.hbm [shape: f32[2,16,128], index: 2, kind: input, shape index: {}]
  %s3 = inlined_call_operand.hbm [shape: f32[2,16,128], index: 3, kind: output, shape index: {0}]
  %s4 = inlined_call_operand.hbm [shape: f32[2,16,128], index: 4, kind: output, shape index: {1}]
  %5 = xla_tuple %s3, %s4
  %s6 = sld [smem:[#allocation0]]
  $region69: #{tpu_custom_call.1} parent=0
    _
  %s8 = ssub.s32 1, %s6
  %s9 = scalar_select 0, %s8, %s6
  $region1: #{tpu_custom_call.1} parent=0
    #allocation2 [shape = 'u8[65536]{0}', space=vmem, size = 0x10000, scoped, tag = 'input window, operand 0']
    #allocation3 [shape = 's32[2]{0}', space=sflag, size = 0x8, scoped, tag = 'scoped memory for tpu_custom_call.1']
    #allocation4 [shape = 's32[2]{0}', space=sflag, size = 0x8, scoped, tag = 'scoped memory for tpu_custom_call.1']
    #allocation5 [shape = 'u8[65536]{0}', space=vmem, size = 0x10000, scoped, tag = 'input window, operand 1']
    #allocation6 [shape = 's32[2]{0}', space=sflag, size = 0x8, scoped, tag = 'scoped memory for tpu_custom_call.1']
    #allocation7 [shape = 'u8[16384]{0}', space=vmem, size = 0x4000, scoped, tag = 'input window, operand 2']
    #allocation8 [shape = 'u8[16384]{0}', space=vmem, size = 0x4000, scoped, tag = 'output window, operand 0']
    #allocation9 [shape = 'u8[16384]{0}', space=vmem, size = 0x4000, scoped, tag = 'output window, operand 1']
    #allocation10 [shape = 's32[2]{0}', space=sflag, size = 0x8, scoped, tag = 'scoped memory for tpu_custom_call.1']
    %10 = vsyncpa [#allocation3], 0
    %s11 = scalar_lea.sflag [#allocation3], 1
    %12 = vsyncpa %s11, 0
    %13 = vsyncpa [#allocation6], 0
    %s14 = scalar_lea.sflag [#allocation6], 1
    %15 = vsyncpa %s14, 0
    %16 = vsyncpa [#allocation4], 0
    %s17 = scalar_lea.sflag [#allocation4], 1
    %18 = vsyncpa %s17, 0
    %19 = vsyncpa [#allocation10], 0
    %s20 = scalar_lea.sflag [#allocation10], 1
    %21 = vsyncpa %s20, 0
    loop: start=0, step=1, limit=4
    $region2: #{tpu_custom_call.1} parent=1 // loop_pre_header
      _
    $region3: #{tpu_custom_call.1} parent=1 // loop_header
      %s23 = sphi 0, %s27
      %p24 = scmp.ge.s32.totalorder %s23, 4
      %s30 = sphi 0, %s42
      %s31 = sphi 0, %s38
      %s32 = sphi 0, %s30
      %s33 = sphi 0, %s31
      %s34 = sphi 0, %s32
      %s35 = sphi 0, %s33
      %s47 = sphi 0, %s49
      %s50 = sphi 0, %s47
      %s51 = sphi 0, %s50
      %s67 = sphi 0, %s51
      %s75 = sphi 0, %s77
      %s78 = sphi 0, %s75
      %s79 = sphi 0, %s78
      %s95 = sphi 0, %s79
      %s103 = sphi 0, %s105
      %s106 = sphi 0, %s103
      %s107 = sphi 0, %s106
      %s123 = sphi 0, %s107
      %s129 = sphi 0, %s131
      %s132 = sphi 0, %s129
      %s133 = sphi 0, %s132
      %s149 = sphi 0, %s133
      %s155 = sphi 0, %s157
      %s158 = sphi 0, %s155
      %s159 = sphi 0, %s158
      %s175 = sphi 0, %s159
    $region4: #{tpu_custom_call.1} parent=1 // loop_header_branch
      %26 = sbr.rel (%p24) target = $region8
    $region5: #{tpu_custom_call.1} parent=1 // loop_body
      %s28 = ssub.s32 %s23, 1
      %s29 = ssub.s32 %s23, 2
      %s36 = sadd.s32 1, %s31
      %p37 = scmp.ge.s32.totalorder %s36, 1
      %s38 = scalar_select %p37, 0, %s36
      %s39 = sadd.s32 1, %s30
      %s40 = scalar_select %p37, %s39, %s30
      %p41 = scmp.ge.s32.totalorder %s40, 2
      %s42 = scalar_select %p41, 0, %s40
      %s43 = ssub.s32 %s30, %s42
      %s44 = ssub.s32 %s31, %s38
      %s45 = sor.u32 %s43, %s44
      %p46 = scmp.eq.s32.totalorder %s45, 0
      %s48 = sadd.s32 %s47, 1
      %s49 = scalar_select %p46, %s47, %s48
      %p52 = pneg %p46
      %p53 = scmp.eq.s32.totalorder %s23, 1
      %p54 = por %p52, %p53
      %p55 = scmp.ne.s32.totalorder %s47, %s50
      %p56 = scmp.eq.s32.totalorder %s23, 0
      %p57 = por %p55, %p56
      %p58 = scmp.ne.s32.totalorder %s47, %s50
      %p59 = scmp.eq.s32.totalorder %s28, 1
      %p60 = por %p58, %p59
      %p61 = scmp.ne.s32.totalorder %s50, %s51
      %p62 = scmp.eq.s32.totalorder %s28, 0
      %p63 = por %p61, %p62
      %p64 = scmp.ne.s32.totalorder %s50, %s51
      %p65 = scmp.eq.s32.totalorder %s29, 1
      %p66 = por %p64, %p65
      %p68 = scmp.ne.s32.totalorder %s51, %s67
      %p69 = scmp.eq.s32.totalorder %s29, 0
      %p70 = por %p68, %p69
      %s71 = ssub.s32 %s30, %s42
      %s72 = ssub.s32 %s31, %s38
      %s73 = sor.u32 %s71, %s72
      %p74 = scmp.eq.s32.totalorder %s73, 0
      %s76 = sadd.s32 %s75, 1
      %s77 = scalar_select %p74, %s75, %s76
      %p80 = pneg %p74
      %p81 = scmp.eq.s32.totalorder %s23, 1
      %p82 = por %p80, %p81
      %p83 = scmp.ne.s32.totalorder %s75, %s78
      %p84 = scmp.eq.s32.totalorder %s23, 0
      %p85 = por %p83, %p84
      %p86 = scmp.ne.s32.totalorder %s75, %s78
      %p87 = scmp.eq.s32.totalorder %s28, 1
      %p88 = por %p86, %p87
      %p89 = scmp.ne.s32.totalorder %s78, %s79
      %p90 = scmp.eq.s32.totalorder %s28, 0
      %p91 = por %p89, %p90
      %p92 = scmp.ne.s32.totalorder %s78, %s79
      %p93 = scmp.eq.s32.totalorder %s29, 1
      %p94 = por %p92, %p93
      %p96 = scmp.ne.s32.totalorder %s79, %s95
      %p97 = scmp.eq.s32.totalorder %s29, 0
      %p98 = por %p96, %p97
      %s99 = ssub.s32 %s30, %s42
      %s100 = ssub.s32 %s31, %s38
      %s101 = sor.u32 %s99, %s100
      %p102 = scmp.eq.s32.totalorder %s101, 0
      %s104 = sadd.s32 %s103, 1
      %s105 = scalar_select %p102, %s103, %s104
      %p108 = pneg %p102
      %p109 = scmp.eq.s32.totalorder %s23, 1
      %p110 = por %p108, %p109
      %p111 = scmp.ne.s32.totalorder %s103, %s106
      %p112 = scmp.eq.s32.totalorder %s23, 0
      %p113 = por %p111, %p112
      %p114 = scmp.ne.s32.totalorder %s103, %s106
      %p115 = scmp.eq.s32.totalorder %s28, 1
      %p116 = por %p114, %p115
      %p117 = scmp.ne.s32.totalorder %s106, %s107
      %p118 = scmp.eq.s32.totalorder %s28, 0
      %p119 = por %p117, %p118
      %p120 = scmp.ne.s32.totalorder %s106, %s107
      %p121 = scmp.eq.s32.totalorder %s29, 1
      %p122 = por %p120, %p121
      %p124 = scmp.ne.s32.totalorder %s107, %s123
      %p125 = scmp.eq.s32.totalorder %s29, 0
      %p126 = por %p124, %p125
      %s127 = ssub.s32 %s30, %s42
      %p128 = scmp.eq.s32.totalorder %s127, 0
      %s130 = sadd.s32 %s129, 1
      %s131 = scalar_select %p128, %s129, %s130
      %p134 = pneg %p128
      %p135 = scmp.eq.s32.totalorder %s23, 1
      %p136 = por %p134, %p135
      %p137 = scmp.ne.s32.totalorder %s129, %s132
      %p138 = scmp.eq.s32.totalorder %s23, 0
      %p139 = por %p137, %p138
      %p140 = scmp.ne.s32.totalorder %s129, %s132
      %p141 = scmp.eq.s32.totalorder %s28, 1
      %p142 = por %p140, %p141
      %p143 = scmp.ne.s32.totalorder %s132, %s133
      %p144 = scmp.eq.s32.totalorder %s28, 0
      %p145 = por %p143, %p144
      %p146 = scmp.ne.s32.totalorder %s132, %s133
      %p147 = scmp.eq.s32.totalorder %s29, 1
      %p148 = por %p146, %p147
      %p150 = scmp.ne.s32.totalorder %s133, %s149
      %p151 = scmp.eq.s32.totalorder %s29, 0
      %p152 = por %p150, %p151
      %s153 = ssub.s32 %s30, %s42
      %p154 = scmp.eq.s32.totalorder %s153, 0
      %s156 = sadd.s32 %s155, 1
      %s157 = scalar_select %p154, %s155, %s156
      %p160 = pneg %p154
      %p161 = scmp.eq.s32.totalorder %s23, 1
      %p162 = por %p160, %p161
      %p163 = scmp.ne.s32.totalorder %s155, %s158
      %p164 = scmp.eq.s32.totalorder %s23, 0
      %p165 = por %p163, %p164
      %p166 = scmp.ne.s32.totalorder %s155, %s158
      %p167 = scmp.eq.s32.totalorder %s28, 1
      %p168 = por %p166, %p167
      %p169 = scmp.ne.s32.totalorder %s158, %s159
      %p170 = scmp.eq.s32.totalorder %s28, 0
      %p171 = por %p169, %p170
      %p172 = scmp.ne.s32.totalorder %s158, %s159
      %p173 = scmp.eq.s32.totalorder %s29, 1
      %p174 = por %p172, %p173
      %p176 = scmp.ne.s32.totalorder %s159, %s175
      %p177 = scmp.eq.s32.totalorder %s29, 0
      %p178 = por %p176, %p177
      %p179 = scmp.le.s32.totalorder 1, %s23
      %p180 = scmp.lt.s32.totalorder %s23, 3
      %p181 = pnand %p179, %p180
      %p182 = pneg %p181
      // Predicated region
      $region9: #{tpu_custom_call.1} parent=5 // pred_check
        _
      $region10: #{tpu_custom_call.1} parent=5 // pred_check_branch
        %184 = sbr.rel (%p181) target = $region12
      $region11: #{tpu_custom_call.1} parent=5 // pred_region
        %s185 = ssub.s32 %s23, 1
      $region12: #{tpu_custom_call.1} parent=5 // pred_fallthru
        _
      %p186 = scmp.lt.s32.totalorder %s23, 2
      // Predicated region
      $region13: #{tpu_custom_call.1} parent=5 // pred_check
        %p187 = pneg %p186
      $region14: #{tpu_custom_call.1} parent=5 // pred_check_branch
        %189 = sbr.rel (%p187) target = $region16
      $region15: #{tpu_custom_call.1} parent=5 // pred_region
        // Predicated region
        $region17: #{tpu_custom_call.1} parent=15 // pred_check
          %p190 = pneg %p57
        $region18: #{tpu_custom_call.1} parent=15 // pred_check_branch
          %192 = sbr.rel (%p190) target = $region20
        $region19: #{tpu_custom_call.1} parent=15 // pred_region
          %s193 = sand.u32 %s47, 1
          %s194 = scalar_lea.sflag [#allocation3], %s193
          %s195 = sand.u32 %s47, 1
          %s196 = smul.addr %s195, 64
          %s197 = scalar_lea.vmem [#allocation2], %s196
          %s198 = smul.u32 2, %s31
          %s200 = ssub.s32 1024, 1024
          %201 = vsyncadd %s194, %s200
          %s202 = smul.addr %s30, 8
          %s203 = sadd.s32 %s198, %s202
          %s204 = smul.addr %s203, 128
          %s205 = scalar_lea.hbm %s0, %s204
          %s206 = sshll.u32 %s197, 4
          %s207 = int_to_ptr.vmem [resolvable:$true] %s206
          %212 = dma.hbm_to_vmem [thread:$0]  %s205, 1024, %s207, %s194, 128, 128, 8
        $region20: #{tpu_custom_call.1} parent=15 // pred_fallthru
          _
        // Predicated region
        $region21: #{tpu_custom_call.1} parent=15 // pred_check
          %p213 = pneg %p85
        $region22: #{tpu_custom_call.1} parent=15 // pred_check_branch
          %215 = sbr.rel (%p213) target = $region24
        $region23: #{tpu_custom_call.1} parent=15 // pred_region
          %s216 = sand.u32 %s23, 1
          %s217 = scalar_lea.sflag [#allocation6], %s216
          %s218 = sand.u32 %s75, 1
          %s219 = smul.addr %s218, 64
          %s220 = scalar_lea.vmem [#allocation5], %s219
          %s221 = smul.u32 2, %s31
          %s223 = ssub.s32 1024, 1024
          %224 = vsyncadd %s217, %s223
          %s225 = smul.addr %s30, 8
          %s226 = sadd.s32 %s221, %s225
          %s227 = smul.addr %s226, 128
          %s228 = scalar_lea.hbm %s1, %s227
          %s229 = sshll.u32 %s220, 4
          %s230 = int_to_ptr.vmem [resolvable:$true] %s229
          %235 = dma.hbm_to_vmem [thread:$0]  %s228, 1024, %s230, %s217, 128, 128, 8
        $region24: #{tpu_custom_call.1} parent=15 // pred_fallthru
          _
        // Predicated region
        $region25: #{tpu_custom_call.1} parent=15 // pred_check
          %p236 = pneg %p113
        $region26: #{tpu_custom_call.1} parent=15 // pred_check_branch
          %238 = sbr.rel (%p236) target = $region28
        $region27: #{tpu_custom_call.1} parent=15 // pred_region
          %s239 = sand.u32 %s23, 1
          %s240 = scalar_lea.sflag [#allocation6], %s239
          %s241 = sand.u32 %s103, 1
          %s242 = smul.addr %s241, 16
          %s243 = scalar_lea.vmem [#allocation7], %s242
          %s244 = smul.u32 2, %s31
          %s246 = ssub.s32 256, 256
          %247 = vsyncadd %s240, %s246
          %s248 = smul.addr %s30, 2
          %s249 = sadd.s32 %s244, %s248
          %s250 = smul.addr %s249, 128
          %s251 = scalar_lea.hbm %s2, %s250
          %s252 = sshll.u32 %s243, 4
          %s253 = int_to_ptr.vmem [resolvable:$true] %s252
          %258 = dma.hbm_to_vmem [thread:$0]  %s251, 256, %s253, %s240, 128, 128, 8
        $region28: #{tpu_custom_call.1} parent=15 // pred_fallthru
          _
      $region16: #{tpu_custom_call.1} parent=5 // pred_fallthru
        _
      %p259 = scmp.le.s32.totalorder 1, %s23
      %p260 = scmp.lt.s32.totalorder %s23, 3
      %p261 = pnand %p259, %p260
      %p262 = pneg %p261
      // Predicated region
      $region29: #{tpu_custom_call.1} parent=5 // pred_check
        _
      $region30: #{tpu_custom_call.1} parent=5 // pred_check_branch
        %264 = sbr.rel (%p261) target = $region32
      $region31: #{tpu_custom_call.1} parent=5 // pred_region
        %s265 = ssub.s32 %s23, 1
        %s266 = sand.u32 %s50, 1
        %s267 = scalar_lea.sflag [#allocation3], %s266
        %s268 = sand.u32 %s50, 1
        %s269 = smul.addr %s268, 64
        %s270 = scalar_lea.vmem [#allocation2], %s269
        // Predicated region
        $region33: #{tpu_custom_call.1} parent=31 // pred_check
          %p271 = pneg %p63
        $region34: #{tpu_custom_call.1} parent=31 // pred_check_branch
          %273 = sbr.rel (%p271) target = $region36
        $region35: #{tpu_custom_call.1} parent=31 // pred_region
          %274 = dma.done %s267, 1024
        $region36: #{tpu_custom_call.1} parent=31 // pred_fallthru
          _
        %s275 = sand.u32 %s28, 1
        %s276 = scalar_lea.sflag [#allocation6], %s275
        %s277 = sand.u32 %s78, 1
        %s278 = smul.addr %s277, 64
        %s279 = scalar_lea.vmem [#allocation5], %s278
        // Predicated region
        $region37: #{tpu_custom_call.1} parent=31 // pred_check
          %p280 = pneg %p91
        $region38: #{tpu_custom_call.1} parent=31 // pred_check_branch
          %282 = sbr.rel (%p280) target = $region40
        $region39: #{tpu_custom_call.1} parent=31 // pred_region
          %283 = dma.done %s276, 1024
        $region40: #{tpu_custom_call.1} parent=31 // pred_fallthru
          _
        %s284 = sand.u32 %s28, 1
        %s285 = scalar_lea.sflag [#allocation6], %s284
        %s286 = sand.u32 %s106, 1
        %s287 = smul.addr %s286, 16
        %s288 = scalar_lea.vmem [#allocation7], %s287
        // Predicated region
        $region41: #{tpu_custom_call.1} parent=31 // pred_check
          %p289 = pneg %p119
        $region42: #{tpu_custom_call.1} parent=31 // pred_check_branch
          %291 = sbr.rel (%p289) target = $region44
        $region43: #{tpu_custom_call.1} parent=31 // pred_region
          %292 = dma.done %s285, 256
        $region44: #{tpu_custom_call.1} parent=31 // pred_fallthru
          _
        %s293 = sand.u32 %s50, 1
        %s294 = scalar_lea.sflag [#allocation3], %s293
        %s295 = sand.u32 %s50, 1
        %s296 = smul.addr %s295, 64
        %s297 = scalar_lea.vmem [#allocation2], %s296
        %p298 = pneg %p63
        %p299 = pneg %p60
        %s300 = sand.u32 %s28, 1
        %s301 = scalar_lea.sflag [#allocation6], %s300
        %s302 = sand.u32 %s78, 1
        %s303 = smul.addr %s302, 64
        %s304 = scalar_lea.vmem [#allocation5], %s303
        %p305 = pneg %p91
        %p306 = pneg %p88
        %s307 = sand.u32 %s28, 1
        %s308 = scalar_lea.sflag [#allocation6], %s307
        %s309 = sand.u32 %s106, 1
        %s310 = smul.addr %s309, 16
        %s311 = scalar_lea.vmem [#allocation7], %s310
        %p312 = pneg %p119
        %p313 = pneg %p116
        %p314 = pneg %p145
        %p315 = pneg %p142
        %s316 = sand.u32 %s132, 1
        %s317 = scalar_lea.sflag [#allocation4], %s316
        %s318 = sand.u32 %s132, 1
        %s319 = smul.addr %s318, 16
        %s320 = scalar_lea.vmem [#allocation8], %s319
        %p321 = pneg %p171
        %p322 = pneg %p168
        %s323 = sand.u32 %s158, 1
        %s324 = scalar_lea.sflag [#allocation10], %s323
        %s325 = sand.u32 %s158, 1
        %s326 = smul.addr %s325, 16
        %s327 = scalar_lea.vmem [#allocation9], %s326
        %s328 = smul.u32 2, %s33
        %s329 = smul.u32 2, %s33
        %s330 = smul.u32 2, %s33
        %p331 = scmp.eq.s32.totalorder %s33, 0
        // Predicated region
        $region45: #{tpu_custom_call.1} parent=31 // pred_check
          %p332 = pneg %p331
        $region46: #{tpu_custom_call.1} parent=31 // pred_check_branch
          %334 = sbr.rel (%p332) target = $region48
        $region47: #{tpu_custom_call.1} parent=31 // pred_region
          %335 = vst [vmem:[%s320] sm:$0xff] 0.0
          %336 = vst [vmem:[%s320 + $0x8] sm:$0xff] 0.0
          %337 = vst [vmem:[%s327] sm:$0xff] 0.0
          %338 = vst [vmem:[%s327 + $0x8] sm:$0xff] 0.0
        $region48: #{tpu_custom_call.1} parent=31 // pred_fallthru
          _
        %v339 = vld [vmem:[%s288] sm:$0xff]
        %v340 = vld [vmem:[%s288 + $0x8] sm:$0xff]
        %v341 = vlaneseq
        %v342 = vshrl.u32 %v341, 7
        %v343 = vadd.s32 %v342, 8
        %s344 = smul.u32 %s33, 16
        %v345 = vstv %s344
        %v346 = vadd.s32 %v342, %v345
        %v347 = vadd.s32 %v343, %v345
        %v348 = vlaneseq
        %v349 = vand.u32 %v348, 127
        %v350 = vmul.u32 %v346, 128
        %v351 = vmul.u32 %v347, 128
        %v352 = vadd.s32 %v350, %v349
        %v353 = vadd.s32 %v351, %v349
        %v354 = vand.u32 %v352, 15
        %v355 = vand.u32 %v353, 15
        %v356 = vcvt.s32.f32 %v354
        %v357 = vcvt.s32.f32 %v355
        %v358 = vshra.s32 %v352, 4
        %v359 = vshra.s32 %v353, 4
        %v360 = vcvt.s32.f32 %v358
        %v361 = vcvt.s32.f32 %v359
        %v362 = vld [vmem:[%s270] sm:$0xff]
        %v363 = vld [vmem:[%s270 + $0x8] sm:$0xff]
        %v364 = vsub.f32 %v356, %v362
        %v365 = vsub.f32 %v357, %v363
        %s366 = scalar_lea.vmem %s270, 16 [#allocation2]
        %v367 = vld [vmem:[%s366] sm:$0xff]
        %v368 = vld [vmem:[%s366 + $0x8] sm:$0xff]
        %v369 = vsub.f32 %v360, %v367
        %v370 = vsub.f32 %v361, %v368
        %s371 = scalar_lea.vmem %s270, 32 [#allocation2]
        %v372 = vld [vmem:[%s371] sm:$0xff]
        %v373 = vld [vmem:[%s371 + $0x8] sm:$0xff]
        %v374 = vadd.f32 %v356, %v372
        %v375 = vadd.f32 %v357, %v373
        %s376 = scalar_lea.vmem %s270, 48 [#allocation2]
        %v377 = vld [vmem:[%s376] sm:$0xff]
        %v378 = vld [vmem:[%s376 + $0x8] sm:$0xff]
        %v379 = vadd.f32 %v360, %v377
        %v380 = vadd.f32 %v361, %v378
        %v381 = vld [vmem:[%s279] sm:$0xff]
        %v382 = vld [vmem:[%s279 + $0x8] sm:$0xff]
        %s383 = scalar_lea.vmem %s279, 16 [#allocation5]
        %v384 = vld [vmem:[%s383] sm:$0xff]
        %v385 = vld [vmem:[%s383 + $0x8] sm:$0xff]
        %s386 = scalar_lea.vmem %s279, 32 [#allocation5]
        %v387 = vld [vmem:[%s386] sm:$0xff]
        %v388 = vld [vmem:[%s386 + $0x8] sm:$0xff]
        %s389 = scalar_lea.vmem %s279, 48 [#allocation5]
        %v390 = vld [vmem:[%s389] sm:$0xff]
        %v391 = vld [vmem:[%s389 + $0x8] sm:$0xff]
        %vm392 = vcmp.gt.f32.partialorder %v339, 0.0
        %vm393 = vcmp.gt.f32.partialorder %v340, 0.0
        %v394 = vsel %vm392, %v339, 0.0
        %v395 = vsel %vm393, %v340, 0.0
        %v396 = vmin.f32 %v374, %v387
        %v397 = vmin.f32 %v375, %v388
        %v398 = vmax.f32 %v364, %v381
        %v399 = vmax.f32 %v365, %v382
        %v400 = vsub.f32 %v396, %v398
        %v401 = vsub.f32 %v397, %v399
        %v402 = vadd.f32 %v400, 1.0
        %v403 = vadd.f32 %v401, 1.0
        %v404 = vmax.f32 %v402, 0.0
        %v405 = vmax.f32 %v403, 0.0
        %v406 = vmin.f32 %v379, %v390
        %v407 = vmin.f32 %v380, %v391
        %v408 = vmax.f32 %v369, %v384
        %v409 = vmax.f32 %v370, %v385
        %v410 = vsub.f32 %v406, %v408
        %v411 = vsub.f32 %v407, %v409
        %v412 = vadd.f32 %v410, 1.0
        %v413 = vadd.f32 %v411, 1.0
        %v414 = vmax.f32 %v412, 0.0
        %v415 = vmax.f32 %v413, 0.0
        %v416 = vmul.f32 %v404, %v414
        %v417 = vmul.f32 %v405, %v415
        %v418 = vmax.f32 %v374, %v387
        %v419 = vmax.f32 %v375, %v388
        %v420 = vmin.f32 %v364, %v381
        %v421 = vmin.f32 %v365, %v382
        %v422 = vsub.f32 %v418, %v420
        %v423 = vsub.f32 %v419, %v421
        %v424 = vadd.f32 %v422, 1.0
        %v425 = vadd.f32 %v423, 1.0
        %v426 = vmax.f32 %v424, 0.0
        %v427 = vmax.f32 %v425, 0.0
        %v428 = vmax.f32 %v379, %v390
        %v429 = vmax.f32 %v380, %v391
        %v430 = vmin.f32 %v369, %v384
        %v431 = vmin.f32 %v370, %v385
        %v432 = vsub.f32 %v428, %v430
        %v433 = vsub.f32 %v429, %v431
        %v434 = vadd.f32 %v432, 1.0
        %v435 = vadd.f32 %v433, 1.0
        %v436 = vmax.f32 %v434, 0.0
        %v437 = vmax.f32 %v435, 0.0
        %v438 = vmul.f32 %v426, %v436
        %v439 = vmul.f32 %v427, %v437
        %v440 = vsub.f32 %v374, %v364
        %v441 = vsub.f32 %v375, %v365
        %v442 = vadd.f32 %v440, 1.0
        %v443 = vadd.f32 %v441, 1.0
        %v444 = vsub.f32 %v379, %v369
        %v445 = vsub.f32 %v380, %v370
        %v446 = vadd.f32 %v444, 1.0
        %v447 = vadd.f32 %v445, 1.0
        %v448 = vmul.f32 %v442, %v446
        %v449 = vmul.f32 %v443, %v447
        %v450 = vsub.f32 %v387, %v381
        %v451 = vsub.f32 %v388, %v382
        %v452 = vadd.f32 %v450, 1.0
        %v453 = vadd.f32 %v451, 1.0
        %v454 = vsub.f32 %v390, %v384
        %v455 = vsub.f32 %v391, %v385
        %v456 = vadd.f32 %v454, 1.0
        %v457 = vadd.f32 %v455, 1.0
        %v458 = vmul.f32 %v452, %v456
        %v459 = vmul.f32 %v453, %v457
        %v460 = vadd.f32 %v448, %v458
        %v461 = vadd.f32 %v449, %v459
        %v462 = vsub.f32 %v460, %v416
        %v463 = vsub.f32 %v461, %v417
        %v464 = vsel %vm392, %v462, 1.0
        %v465 = vsel %vm393, %v463, 1.0
        %v466 = vrcp.pop %v464
        %v467 = vrcp.pop %v465
        %v468 = vsel %vm392, %v438, 1.0
        %v469 = vsel %vm393, %v439, 1.0
        %v470 = vrcp.pop %v468
        %v471 = vrcp.pop %v469
        %v472 = vmul.f32 %v416, %v466
        %v473 = vmul.f32 %v417, %v467
        %v474 = vsub.f32 2.0, %v472
        %v475 = vsub.f32 2.0, %v473
        %v476 = vmul.f32 %v462, %v470
        %v477 = vmul.f32 %v463, %v471
        %v478 = vsub.f32 %v474, %v476
        %v479 = vsub.f32 %v475, %v477
        %v480 = vld [vmem:[%s320] sm:$0xff]
        %v481 = vld [vmem:[%s320 + $0x8] sm:$0xff]
        %v482 = vmul.f32 %v478, %v394
        %v483 = vmul.f32 %v479, %v395
        %v484 = vadd.f32 %v480, %v482
        %v485 = vadd.f32 %v481, %v483
        %486 = vst [vmem:[%s320] sm:$0xff] %v484
        %487 = vst [vmem:[%s320 + $0x8] sm:$0xff] %v485
        %v488 = vld [vmem:[%s327] sm:$0xff]
        %v489 = vld [vmem:[%s327 + $0x8] sm:$0xff]
        %v490 = vadd.f32 %v488, %v394
        %v491 = vadd.f32 %v489, %v395
        %492 = vst [vmem:[%s327] sm:$0xff] %v490
        %493 = vst [vmem:[%s327 + $0x8] sm:$0xff] %v491
        %s494 = sand.u32 %s132, 1
        %s495 = scalar_lea.sflag [#allocation4], %s494
        %s496 = sand.u32 %s132, 1
        %s497 = smul.addr %s496, 16
        %s498 = scalar_lea.vmem [#allocation8], %s497
        %s499 = sand.u32 %s158, 1
        %s500 = scalar_lea.sflag [#allocation10], %s499
        %s501 = sand.u32 %s158, 1
        %s502 = smul.addr %s501, 16
        %s503 = scalar_lea.vmem [#allocation9], %s502
        // Predicated region
        $region49: #{tpu_custom_call.1} parent=31 // pred_check
          %p504 = pneg %p142
        $region50: #{tpu_custom_call.1} parent=31 // pred_check_branch
          %506 = sbr.rel (%p504) target = $region52
        $region51: #{tpu_custom_call.1} parent=31 // pred_region
          %s508 = ssub.s32 256, 256
          %509 = vsyncadd %s495, %s508
          %s510 = smul.addr %s32, 2
          %s511 = smul.addr %s510, 128
          %s512 = scalar_lea.hbm %s3, %s511
          %s513 = sshll.u32 %s498, 4
          %s514 = int_to_ptr.vmem [resolvable:$true] %s513
          %519 = dma.vmem_to_hbm [thread:$0]  %s514, 256, %s512, %s495, 128, 128, 8
        $region52: #{tpu_custom_call.1} parent=31 // pred_fallthru
          _
        // Predicated region
        $region53: #{tpu_custom_call.1} parent=31 // pred_check
          %p520 = pneg %p168
        $region54: #{tpu_custom_call.1} parent=31 // pred_check_branch
          %522 = sbr.rel (%p520) target = $region56
        $region55: #{tpu_custom_call.1} parent=31 // pred_region
          %s524 = ssub.s32 256, 256
          %525 = vsyncadd %s500, %s524
          %s526 = smul.addr %s32, 2
          %s527 = smul.addr %s526, 128
          %s528 = scalar_lea.hbm %s4, %s527
          %s529 = sshll.u32 %s503, 4
          %s530 = int_to_ptr.vmem [resolvable:$true] %s529
          %535 = dma.vmem_to_hbm [thread:$0]  %s530, 256, %s528, %s500, 128, 128, 8
        $region56: #{tpu_custom_call.1} parent=31 // pred_fallthru
          _
      $region32: #{tpu_custom_call.1} parent=5 // pred_fallthru
        _
      %p536 = scmp.le.s32.totalorder 2, %s23
      // Predicated region
      $region57: #{tpu_custom_call.1} parent=5 // pred_check
        %p537 = pneg %p536
      $region58: #{tpu_custom_call.1} parent=5 // pred_check_branch
        %539 = sbr.rel (%p537) target = $region60
      $region59: #{tpu_custom_call.1} parent=5 // pred_region
        %s540 = ssub.s32 %s23, 2
        // Predicated region
        $region61: #{tpu_custom_call.1} parent=59 // pred_check
          %p541 = pneg %p148
        $region62: #{tpu_custom_call.1} parent=59 // pred_check_branch
          %543 = sbr.rel (%p541) target = $region64
        $region63: #{tpu_custom_call.1} parent=59 // pred_region
          %s544 = sand.u32 %s133, 1
          %s545 = scalar_lea.sflag [#allocation4], %s544
          %s546 = sand.u32 %s133, 1
          %s547 = smul.addr %s546, 16
          %s548 = scalar_lea.vmem [#allocation8], %s547
          %549 = dma.done %s545, 256
        $region64: #{tpu_custom_call.1} parent=59 // pred_fallthru
          _
        // Predicated region
        $region65: #{tpu_custom_call.1} parent=59 // pred_check
          %p550 = pneg %p174
        $region66: #{tpu_custom_call.1} parent=59 // pred_check_branch
          %552 = sbr.rel (%p550) target = $region68
        $region67: #{tpu_custom_call.1} parent=59 // pred_region
          %s553 = sand.u32 %s159, 1
          %s554 = scalar_lea.sflag [#allocation10], %s553
          %s555 = sand.u32 %s159, 1
          %s556 = smul.addr %s555, 16
          %s557 = scalar_lea.vmem [#allocation9], %s556
          %558 = dma.done %s554, 256
        $region68: #{tpu_custom_call.1} parent=59 // pred_fallthru
          _
      $region60: #{tpu_custom_call.1} parent=5 // pred_fallthru
        _
    $region6: #{tpu_custom_call.1} parent=1 // loop_footer
      %s27 = sadd.s32 1, %s23
    $region7: #{tpu_custom_call.1} parent=1 // loop_footer_branch
      %22 = sbr.rel target = $region3
    $region8: #{tpu_custom_call.1} parent=1 // loop_exit
      _
    %559 = vsyncpa [#allocation3], 1
    %s560 = scalar_lea.sflag [#allocation3], 1
    %561 = vsyncpa %s560, 1
    %562 = vsyncpa [#allocation6], 1
    %s563 = scalar_lea.sflag [#allocation6], 1
    %564 = vsyncpa %s563, 1
    %565 = vsyncpa [#allocation4], 1
    %s566 = scalar_lea.sflag [#allocation4], 1
    %567 = vsyncpa %s566, 1
    %568 = vsyncpa [#allocation10], 1
    %s569 = scalar_lea.sflag [#allocation10], 1
    %570 = vsyncpa %s569, 1

</llo_original>
